<compile_context>
chip_gen: v5e
topology: v5e:2x2
jax: 0.10.0
libtpu: 0.0.40
codegen_flags: <defaults>
</compile_context>

<pallas_src>
import functools

import jax
import jax.numpy as jnp
from jax.experimental import pallas as pl
from jax.experimental.pallas import tpu as pltpu

IGNORE_LABEL = -1


def _consistency_kernel(x_ref, lab_ref, w_ref, b_ref,       # inputs
                        logits_ref, loss_ref,                # outputs
                        acc_ref,                             # SMEM scratch
                        *, ldb, eta, total_pixels):
    # x_ref:      (m, 1, Cin, TP) f32  noisy input copies, pixels on the lane axis
    # lab_ref:    (1, 1, TP)      i32  labels for this pixel tile
    # w_ref:      (NC, Cin)       f32  1x1-conv weight (seg head)
    # b_ref:      (NC, 1)         f32  bias
    # logits_ref: (1, NC, TP)     f32  copy-0 logits block (lane-dense store)
    # loss_ref:   (1, 1)          f32  SMEM scalar output (total loss)
    # acc_ref:    (3,)            f32  SMEM accumulators [ce_sum, valid_count, cons_sum]
    n_i = pl.program_id(0)
    t_i = pl.program_id(1)
    first = jnp.logical_and(n_i == 0, t_i == 0)
    last = jnp.logical_and(n_i == pl.num_programs(0) - 1,
                           t_i == pl.num_programs(1) - 1)

    @pl.when(first)
    def _():
        acc_ref[0] = jnp.float32(0.0)
        acc_ref[1] = jnp.float32(0.0)
        acc_ref[2] = jnp.float32(0.0)

    w = w_ref[...]                        # (NC, Cin)
    b = b_ref[...]                        # (NC, 1)
    nc, cin = w.shape
    m = x_ref.shape[0]
    tp = x_ref.shape[-1]
    inv_m = 1.0 / float(m)

    lab = lab_ref[0]                      # (1, TP) int32
    valid = lab != IGNORE_LABEL           # (1, TP) bool
    cls = jax.lax.broadcasted_iota(jnp.int32, (nc, tp), 0)

    ce_tile = jnp.float32(0.0)
    probs = []
    logps = []
    for j in range(m):                    # m is small & static -> unrolled
        xj = x_ref[j, 0]                  # (Cin, TP)
        # 1x1 conv as unrolled VPU multiply-adds (too small for the MXU).
        lg = b + w[:, 0:1] * xj[0:1, :]   # (NC, TP)
        for k in range(1, cin):
            lg = lg + w[:, k:k + 1] * xj[k:k + 1, :]
        if j == 0:
            logits_ref[0] = lg            # only copy 0 is returned by the module

        # Numerically stable log-softmax / softmax over the class (sublane) axis.
        mx = jnp.max(lg, axis=0, keepdims=True)          # (1, TP)
        ex = jnp.exp(lg - mx)                            # (NC, TP)
        se = jnp.sum(ex, axis=0, keepdims=True)          # (1, TP)
        logp = lg - (jnp.log(se) + mx)                   # (NC, TP)
        p = ex / se                                      # (NC, TP)
        probs.append(p)
        logps.append(logp)

        # Pixel-wise cross entropy with ignore_label (select instead of one-hot mul).
        picked = jnp.sum(jnp.where(cls == lab, logp, 0.0), axis=0, keepdims=True)
        ce_tile = ce_tile + jnp.sum(jnp.where(valid, -picked, 0.0))

    count_tile = jnp.sum(valid.astype(jnp.float32)) * float(m)

    # Consistency term: avg softmax, KL(avg || softmax_j), entropy(avg).
    avg = probs[0]
    for j in range(1, m):
        avg = avg + probs[j]
    avg = avg * inv_m                                    # (NC, TP)
    xlogx = jnp.sum(avg * jnp.log(jnp.maximum(avg, 1e-20)),
                    axis=0, keepdims=True)               # (1, TP)
    ent = -xlogx                                         # entropy(avg)
    kl = jnp.zeros_like(ent)
    for j in range(m):
        kl = kl + (xlogx - jnp.sum(avg * logps[j], axis=0, keepdims=True))
    kl = kl * inv_m
    cons_tile = jnp.sum(ldb * kl + eta * ent)

    acc_ref[0] = acc_ref[0] + ce_tile
    acc_ref[1] = acc_ref[1] + count_tile
    acc_ref[2] = acc_ref[2] + cons_tile

    @pl.when(last)
    def _():
        ce_mean = acc_ref[0] / jnp.maximum(acc_ref[1], 1.0)
        loss_ref[0, 0] = (ce_mean * inv_m) + (acc_ref[2] / float(total_pixels))


def _pick_tile(hp, max_tile):
    """Largest multiple of 128 that divides hp and is <= max_tile (else full hp)."""
    best = None
    t = 128
    while t <= min(hp, max_tile):
        if hp % t == 0:
            best = t
        t += 128
    return best if best is not None else hp


def _make_noisy_copies(inputs, *, m, sigma, std, rng):
    """torch.cat([inputs + sigma*randn/std for _ in range(m)], dim=0) as an (m, ...) stack."""
    if sigma > 0.0:
        noise = sigma * jax.random.normal(rng, (m,) + inputs.shape, jnp.float32) / std
        return inputs[None] + noise
    return jnp.broadcast_to(inputs[None], (m,) + inputs.shape)


def consistency_reg_forward(inputs, labels, weight, bias, *, m=2, ldb=1.0, eta=0.5,
                            sigma=0.0, std=1.0, rng=None, max_tile_pixels=1024):
    """inputs: (N, Cin, H, W) f32; labels: (N, H, W) i32; weight: (NC, Cin); bias: (NC,).
    Returns (loss of shape (1,), outputs of shape (N, NC, H, W))."""
    n, cin, h, w = inputs.shape
    nc = weight.shape[0]
    hp = h * w
    if rng is None:
        rng = jax.random.PRNGKey(0)

    # Gaussian augmentation (m noisy copies) — NCHW layout kept, only free reshapes below.
    x_c = _make_noisy_copies(inputs, m=m, sigma=sigma, std=std, rng=rng)
    x_c = x_c.reshape(m, n, cin, hp).astype(jnp.float32)
    lab = labels.reshape(n, 1, hp).astype(jnp.int32)
    w2d = weight.reshape(nc, cin).astype(jnp.float32)
    b2d = bias.reshape(nc, 1).astype(jnp.float32)

    # Pixel tile: lane-dense (multiple of 128). Tune max_tile_pixels per generation:
    # smaller for v5e's 16 MiB scoped VMEM, larger for v6e; blocks here are tiny anyway.
    tp = _pick_tile(hp, max_tile_pixels)
    grid = (n, hp // tp)

    kernel = functools.partial(_consistency_kernel, ldb=float(ldb), eta=float(eta),
                               total_pixels=n * hp)

    logits0, loss = pl.pallas_call(
        kernel,
        grid=grid,
        in_specs=[
            pl.BlockSpec((m, 1, cin, tp), lambda ni, ti: (0, ni, 0, ti)),   # x copies
            pl.BlockSpec((1, 1, tp), lambda ni, ti: (ni, 0, ti)),           # labels
            pl.BlockSpec((nc, cin), lambda ni, ti: (0, 0)),                 # weight (resident)
            pl.BlockSpec((nc, 1), lambda ni, ti: (0, 0)),                   # bias (resident)
        ],
        out_specs=(
            pl.BlockSpec((1, nc, tp), lambda ni, ti: (ni, 0, ti)),          # copy-0 logits
            pl.BlockSpec(memory_space=pltpu.SMEM),                          # scalar loss
        ),
        out_shape=(
            jax.ShapeDtypeStruct((n, nc, hp), jnp.float32),
            jax.ShapeDtypeStruct((1, 1), jnp.float32),
        ),
        scratch_shapes=[pltpu.SMEM((3,), jnp.float32)],
        compiler_params=pltpu.CompilerParams(
            dimension_semantics=("arbitrary", "arbitrary")),
    )(x_c, lab, w2d, b2d)

    outputs = logits0.reshape(n, nc, h, w)     # already NCHW — no transpose needed
    return loss.reshape(1), outputs            # torch.unsqueeze(loss, 0) -> shape (1,)


def _reference_forward(inputs, labels, weight, bias, *, m, ldb, eta, sigma, std, rng):
    """Pure-JAX reference of ConsistencyRegModel.forward (same synthetic 1x1-conv head)."""
    x_c = _make_noisy_copies(inputs, m=m, sigma=sigma, std=std, rng=rng)   # (m,N,C,H,W)
    nc = weight.shape[0]
    logits = jnp.einsum('mnchw,kc->mnkhw', x_c, weight,
                        precision=jax.lax.Precision.HIGHEST) + bias.reshape(1, 1, nc, 1, 1)
    logp = jax.nn.log_softmax(logits, axis=2)
    lab = jnp.broadcast_to(labels[None], (m,) + labels.shape)              # (m,N,H,W)
    valid = lab != IGNORE_LABEL
    picked = jnp.take_along_axis(logp, jnp.where(valid, lab, 0)[:, :, None], axis=2)[:, :, 0]
    ce = jnp.sum(jnp.where(valid, -picked, 0.0)) / jnp.maximum(jnp.sum(valid), 1)
    loss = ce / m
    p = jax.nn.softmax(logits, axis=2)
    avg = jnp.mean(p, axis=0)                                              # (N,NC,H,W)
    log_avg = jnp.log(jnp.maximum(avg, 1e-20))
    ent = -jnp.sum(avg * log_avg, axis=1)                                  # (N,H,W)
    kl = jnp.mean(jnp.sum(avg[None] * (log_avg[None] - logp), axis=2), axis=0)
    loss = loss + jnp.mean(ldb * kl + eta * ent)
    return loss, logits[0]


if __name__ == "__main__":
    key = jax.random.PRNGKey(0)
    k_x, k_w, k_b, k_l, k_n = jax.random.split(key, 5)

    N, CIN, H, W = 2, 4, 16, 16
    NUM_CLASSES = 8
    M, LDB, ETA, SIGMA = 2, 1.0, 0.5, 0.1

    inputs = jax.random.normal(k_x, (N, CIN, H, W), dtype=jnp.float32)
    labels = jax.random.randint(k_l, (N, H, W), 0, NUM_CLASSES, dtype=jnp.int32)
    labels = labels.at[:, 0, :].set(IGNORE_LABEL)          # some ignore_label pixels

    # Synthetic 1x1-conv segmentation head parameters (stand-in for the HRNet model).
    weight = 0.1 * jax.random.normal(k_w, (NUM_CLASSES, CIN), dtype=jnp.float32)
    bias = 0.01 * jax.random.normal(k_b, (NUM_CLASSES,), dtype=jnp.float32)
    std = jnp.ones((1, CIN, 1, 1), jnp.float32)

    loss, outputs = consistency_reg_forward(
        inputs, labels, weight, bias,
        m=M, ldb=LDB, eta=ETA, sigma=SIGMA, std=std, rng=k_n)
    jax.block_until_ready((loss, outputs))

    assert loss.shape == (1,)
    assert outputs.shape == (N, NUM_CLASSES, H, W)

    ref_loss, ref_out = _reference_forward(
        inputs, labels, weight, bias,
        m=M, ldb=LDB, eta=ETA, sigma=SIGMA, std=std, rng=k_n)
    assert jnp.allclose(outputs, ref_out, rtol=1e-4, atol=1e-4), "logits mismatch vs reference"
    assert jnp.allclose(loss[0], ref_loss, rtol=1e-4, atol=1e-4), "loss mismatch vs reference"
    assert bool(jnp.isfinite(loss).all())

    print("KERNEL_OK")
</pallas_src>

<mosaic_0001>
module attributes {stable_mosaic.version = 11 : i64} {
  func.func @_consistency_kernel(%arg0: i32, %arg1: i32, %arg2: memref<2x1x4x256xf32, #tpu.memory_space<vmem>>, %arg3: memref<1x1x256xi32, #tpu.memory_space<vmem>>, %arg4: memref<8x4xf32, #tpu.memory_space<vmem>>, %arg5: memref<8x1xf32, #tpu.memory_space<vmem>>, %arg6: memref<1x8x256xf32, #tpu.memory_space<vmem>>, %arg7: memref<1x1xf32, #tpu.memory_space<smem>>, %arg8: memref<3xf32, #tpu.memory_space<smem>>) attributes {dimension_semantics = [#tpu.dimension_semantics<arbitrary>, #tpu.dimension_semantics<arbitrary>], iteration_bounds = array<i64: 2, 1>, scalar_prefetch = 0 : i64, scratch_operands = 1 : i64, tpu.core_type = #tpu.core_type<tc>, window_params = [{transform_indices = @transform_0, window_bounds = array<i64: 2, 1, 4, 256>}, {transform_indices = @transform_1, window_bounds = array<i64: 1, 1, 256>}, {pipeline_mode = #tpu.pipeline_mode<synchronous>, transform_indices = @transform_2, window_bounds = array<i64: 8, 4>}, {pipeline_mode = #tpu.pipeline_mode<synchronous>, transform_indices = @transform_3, window_bounds = array<i64: 8, 1>}, {transform_indices = @transform_4, window_bounds = array<i64: 1, 8, 256>}, {transform_indices = @transform_5, window_bounds = array<i64: 1, 1>}]} {
    %c0_i32 = arith.constant 0 : i32
    %0 = arith.cmpi eq, %arg0, %c0_i32 : i32
    %c0_i32_0 = arith.constant 0 : i32
    %1 = arith.cmpi eq, %arg1, %c0_i32_0 : i32
    %2 = arith.andi %0, %1 : i1
    %c1_i32 = arith.constant 1 : i32
    %3 = arith.cmpi eq, %arg0, %c1_i32 : i32
    %c0_i32_1 = arith.constant 0 : i32
    %4 = arith.cmpi eq, %arg1, %c0_i32_1 : i32
    %5 = arith.andi %3, %4 : i1
    %6 = arith.extui %2 : i1 to i32
    %c0_i32_2 = arith.constant 0 : i32
    %7 = arith.cmpi ne, %6, %c0_i32_2 : i32
    scf.if %7 {
      %cst_52 = arith.constant 0.000000e+00 : f32
      %c0_53 = arith.constant 0 : index
      %179 = memref.load %arg8[%c0_53] : memref<3xf32, #tpu.memory_space<smem>>
      memref.store %cst_52, %arg8[%c0_53] : memref<3xf32, #tpu.memory_space<smem>>
      %cst_54 = arith.constant 0.000000e+00 : f32
      %c1_55 = arith.constant 1 : index
      %180 = memref.load %arg8[%c1_55] : memref<3xf32, #tpu.memory_space<smem>>
      memref.store %cst_54, %arg8[%c1_55] : memref<3xf32, #tpu.memory_space<smem>>
      %cst_56 = arith.constant 0.000000e+00 : f32
      %c2_57 = arith.constant 2 : index
      %181 = memref.load %arg8[%c2_57] : memref<3xf32, #tpu.memory_space<smem>>
      memref.store %cst_56, %arg8[%c2_57] : memref<3xf32, #tpu.memory_space<smem>>
    } else {
    }
    %c0 = arith.constant 0 : index
    %c0_3 = arith.constant 0 : index
    %8 = vector.load %arg4[%c0, %c0_3] : memref<8x4xf32, #tpu.memory_space<vmem>>, vector<8x4xf32>
    %c0_4 = arith.constant 0 : index
    %c0_5 = arith.constant 0 : index
    %9 = vector.load %arg5[%c0_4, %c0_5] : memref<8x1xf32, #tpu.memory_space<vmem>>, vector<8x1xf32>
    %c0_6 = arith.constant 0 : index
    %c0_7 = arith.constant 0 : index
    %c0_8 = arith.constant 0 : index
    %10 = vector.load %arg3[%c0_6, %c0_7, %c0_8] : memref<1x1x256xi32, #tpu.memory_space<vmem>>, vector<1x1x256xi32>
    %11 = vector.shape_cast %10 : vector<1x1x256xi32> to vector<1x256xi32>
    %c-1_i32 = arith.constant -1 : i32
    %12 = vector.broadcast %c-1_i32 : i32 to vector<1x256xi32>
    %13 = arith.cmpi ne, %11, %12 : vector<1x256xi32>
    %14 = tpu.iota {dimensions = array<i32: 0>} : vector<8x256xi32>
    %c0_9 = arith.constant 0 : index
    %c0_10 = arith.constant 0 : index
    %c0_11 = arith.constant 0 : index
    %c0_12 = arith.constant 0 : index
    %15 = vector.load %arg2[%c0_9, %c0_10, %c0_11, %c0_12] : memref<2x1x4x256xf32, #tpu.memory_space<vmem>>, vector<1x1x4x256xf32>
    %16 = vector.shape_cast %15 : vector<1x1x4x256xf32> to vector<4x256xf32>
    %17 = vector.extract_strided_slice %8 {offsets = [0, 0], sizes = [8, 1], strides = [1, 1]} : vector<8x4xf32> to vector<8x1xf32>
    %18 = vector.extract_strided_slice %16 {offsets = [0, 0], sizes = [1, 256], strides = [1, 1]} : vector<4x256xf32> to vector<1x256xf32>
    %19 = vector.broadcast %17 : vector<8x1xf32> to vector<8x256xf32>
    %20 = vector.broadcast %18 : vector<1x256xf32> to vector<8x256xf32>
    %21 = arith.mulf %19, %20 : vector<8x256xf32>
    %22 = vector.broadcast %9 : vector<8x1xf32> to vector<8x256xf32>
    %23 = arith.addf %22, %21 : vector<8x256xf32>
    %24 = vector.extract_strided_slice %8 {offsets = [0, 1], sizes = [8, 1], strides = [1, 1]} : vector<8x4xf32> to vector<8x1xf32>
    %25 = vector.extract_strided_slice %16 {offsets = [1, 0], sizes = [1, 256], strides = [1, 1]} : vector<4x256xf32> to vector<1x256xf32>
    %26 = vector.broadcast %24 : vector<8x1xf32> to vector<8x256xf32>
    %27 = vector.broadcast %25 : vector<1x256xf32> to vector<8x256xf32>
    %28 = arith.mulf %26, %27 : vector<8x256xf32>
    %29 = arith.addf %23, %28 : vector<8x256xf32>
    %30 = vector.extract_strided_slice %8 {offsets = [0, 2], sizes = [8, 1], strides = [1, 1]} : vector<8x4xf32> to vector<8x1xf32>
    %31 = vector.extract_strided_slice %16 {offsets = [2, 0], sizes = [1, 256], strides = [1, 1]} : vector<4x256xf32> to vector<1x256xf32>
    %32 = vector.broadcast %30 : vector<8x1xf32> to vector<8x256xf32>
    %33 = vector.broadcast %31 : vector<1x256xf32> to vector<8x256xf32>
    %34 = arith.mulf %32, %33 : vector<8x256xf32>
    %35 = arith.addf %29, %34 : vector<8x256xf32>
    %36 = vector.extract_strided_slice %8 {offsets = [0, 3], sizes = [8, 1], strides = [1, 1]} : vector<8x4xf32> to vector<8x1xf32>
    %37 = vector.extract_strided_slice %16 {offsets = [3, 0], sizes = [1, 256], strides = [1, 1]} : vector<4x256xf32> to vector<1x256xf32>
    %38 = vector.broadcast %36 : vector<8x1xf32> to vector<8x256xf32>
    %39 = vector.broadcast %37 : vector<1x256xf32> to vector<8x256xf32>
    %40 = arith.mulf %38, %39 : vector<8x256xf32>
    %41 = arith.addf %35, %40 : vector<8x256xf32>
    %c0_13 = arith.constant 0 : index
    %c0_14 = arith.constant 0 : index
    %c0_15 = arith.constant 0 : index
    %42 = vector.load %arg6[%c0_13, %c0_14, %c0_15] : memref<1x8x256xf32, #tpu.memory_space<vmem>>, vector<1x8x256xf32>
    %43 = vector.shape_cast %42 : vector<1x8x256xf32> to vector<8x256xf32>
    %44 = vector.shape_cast %41 : vector<8x256xf32> to vector<1x8x256xf32>
    tpu.vector_store %arg6[%c0_13, %c0_14, %c0_15], %44 {strides = array<i32>} : memref<1x8x256xf32, #tpu.memory_space<vmem>>, vector<1x8x256xf32>,
    %cst = arith.constant dense<0xFF800000> : vector<256xf32>
    %45 = vector.multi_reduction <maximumf>, %41, %cst [0] : vector<8x256xf32> to vector<256xf32>
    %46 = vector.shape_cast %45 : vector<256xf32> to vector<1x256xf32>
    %47 = vector.broadcast %46 : vector<1x256xf32> to vector<8x256xf32>
    %48 = arith.subf %41, %47 : vector<8x256xf32>
    %49 = math.exp %48 : vector<8x256xf32>
    %cst_16 = arith.constant dense<0.000000e+00> : vector<256xf32>
    %50 = vector.multi_reduction <add>, %49, %cst_16 [0] : vector<8x256xf32> to vector<256xf32>
    %51 = vector.shape_cast %50 : vector<256xf32> to vector<1x256xf32>
    %52 = math.log %51 : vector<1x256xf32>
    %53 = arith.addf %52, %46 : vector<1x256xf32>
    %54 = vector.broadcast %53 : vector<1x256xf32> to vector<8x256xf32>
    %55 = arith.subf %41, %54 : vector<8x256xf32>
    %56 = vector.broadcast %51 : vector<1x256xf32> to vector<8x256xf32>
    %57 = arith.divf %49, %56 : vector<8x256xf32>
    %58 = vector.broadcast %11 : vector<1x256xi32> to vector<8x256xi32>
    %59 = arith.cmpi eq, %14, %58 : vector<8x256xi32>
    %cst_17 = arith.constant 0.000000e+00 : f32
    %60 = vector.broadcast %cst_17 : f32 to vector<8x256xf32>
    %61 = arith.select %59, %55, %60 : vector<8x256xi1>, vector<8x256xf32>
    %cst_18 = arith.constant dense<0.000000e+00> : vector<256xf32>
    %62 = vector.multi_reduction <add>, %61, %cst_18 [0] : vector<8x256xf32> to vector<256xf32>
    %63 = vector.shape_cast %62 : vector<256xf32> to vector<1x256xf32>
    %cst_19 = arith.constant 0.000000e+00 : f32
    %64 = vector.broadcast %cst_19 : f32 to vector<1x256xf32>
    %65 = arith.subf %64, %63 : vector<1x256xf32>
    %cst_20 = arith.constant 0.000000e+00 : f32
    %66 = vector.broadcast %cst_20 : f32 to vector<1x256xf32>
    %67 = arith.select %13, %65, %66 : vector<1x256xi1>, vector<1x256xf32>
    %68 = vector.shape_cast %67 : vector<1x256xf32> to vector<1x1x256xf32>
    %cst_21 = arith.constant dense<0.000000e+00> : vector<1xf32>
    %69 = vector.multi_reduction <add>, %68, %cst_21 [1, 2] : vector<1x1x256xf32> to vector<1xf32>
    %70 = vector.shape_cast %69 : vector<1xf32> to vector<1x1x1xf32>
    %71 = vector.extract %70[0, 0, 0] : f32 from vector<1x1x1xf32>
    %cst_22 = arith.constant 0.000000e+00 : f32
    %72 = arith.addf %cst_22, %71 : f32
    %c1 = arith.constant 1 : index
    %c0_23 = arith.constant 0 : index
    %c0_24 = arith.constant 0 : index
    %c0_25 = arith.constant 0 : index
    %73 = vector.load %arg2[%c1, %c0_23, %c0_24, %c0_25] : memref<2x1x4x256xf32, #tpu.memory_space<vmem>>, vector<1x1x4x256xf32>
    %74 = vector.shape_cast %73 : vector<1x1x4x256xf32> to vector<4x256xf32>
    %75 = vector.extract_strided_slice %8 {offsets = [0, 0], sizes = [8, 1], strides = [1, 1]} : vector<8x4xf32> to vector<8x1xf32>
    %76 = vector.extract_strided_slice %74 {offsets = [0, 0], sizes = [1, 256], strides = [1, 1]} : vector<4x256xf32> to vector<1x256xf32>
    %77 = vector.broadcast %75 : vector<8x1xf32> to vector<8x256xf32>
    %78 = vector.broadcast %76 : vector<1x256xf32> to vector<8x256xf32>
    %79 = arith.mulf %77, %78 : vector<8x256xf32>
    %80 = vector.broadcast %9 : vector<8x1xf32> to vector<8x256xf32>
    %81 = arith.addf %80, %79 : vector<8x256xf32>
    %82 = vector.extract_strided_slice %8 {offsets = [0, 1], sizes = [8, 1], strides = [1, 1]} : vector<8x4xf32> to vector<8x1xf32>
    %83 = vector.extract_strided_slice %74 {offsets = [1, 0], sizes = [1, 256], strides = [1, 1]} : vector<4x256xf32> to vector<1x256xf32>
    %84 = vector.broadcast %82 : vector<8x1xf32> to vector<8x256xf32>
    %85 = vector.broadcast %83 : vector<1x256xf32> to vector<8x256xf32>
    %86 = arith.mulf %84, %85 : vector<8x256xf32>
    %87 = arith.addf %81, %86 : vector<8x256xf32>
    %88 = vector.extract_strided_slice %8 {offsets = [0, 2], sizes = [8, 1], strides = [1, 1]} : vector<8x4xf32> to vector<8x1xf32>
    %89 = vector.extract_strided_slice %74 {offsets = [2, 0], sizes = [1, 256], strides = [1, 1]} : vector<4x256xf32> to vector<1x256xf32>
    %90 = vector.broadcast %88 : vector<8x1xf32> to vector<8x256xf32>
    %91 = vector.broadcast %89 : vector<1x256xf32> to vector<8x256xf32>
    %92 = arith.mulf %90, %91 : vector<8x256xf32>
    %93 = arith.addf %87, %92 : vector<8x256xf32>
    %94 = vector.extract_strided_slice %8 {offsets = [0, 3], sizes = [8, 1], strides = [1, 1]} : vector<8x4xf32> to vector<8x1xf32>
    %95 = vector.extract_strided_slice %74 {offsets = [3, 0], sizes = [1, 256], strides = [1, 1]} : vector<4x256xf32> to vector<1x256xf32>
    %96 = vector.broadcast %94 : vector<8x1xf32> to vector<8x256xf32>
    %97 = vector.broadcast %95 : vector<1x256xf32> to vector<8x256xf32>
    %98 = arith.mulf %96, %97 : vector<8x256xf32>
    %99 = arith.addf %93, %98 : vector<8x256xf32>
    %cst_26 = arith.constant dense<0xFF800000> : vector<256xf32>
    %100 = vector.multi_reduction <maximumf>, %99, %cst_26 [0] : vector<8x256xf32> to vector<256xf32>
    %101 = vector.shape_cast %100 : vector<256xf32> to vector<1x256xf32>
    %102 = vector.broadcast %101 : vector<1x256xf32> to vector<8x256xf32>
    %103 = arith.subf %99, %102 : vector<8x256xf32>
    %104 = math.exp %103 : vector<8x256xf32>
    %cst_27 = arith.constant dense<0.000000e+00> : vector<256xf32>
    %105 = vector.multi_reduction <add>, %104, %cst_27 [0] : vector<8x256xf32> to vector<256xf32>
    %106 = vector.shape_cast %105 : vector<256xf32> to vector<1x256xf32>
    %107 = math.log %106 : vector<1x256xf32>
    %108 = arith.addf %107, %101 : vector<1x256xf32>
    %109 = vector.broadcast %108 : vector<1x256xf32> to vector<8x256xf32>
    %110 = arith.subf %99, %109 : vector<8x256xf32>
    %111 = vector.broadcast %106 : vector<1x256xf32> to vector<8x256xf32>
    %112 = arith.divf %104, %111 : vector<8x256xf32>
    %113 = vector.broadcast %11 : vector<1x256xi32> to vector<8x256xi32>
    %114 = arith.cmpi eq, %14, %113 : vector<8x256xi32>
    %cst_28 = arith.constant 0.000000e+00 : f32
    %115 = vector.broadcast %cst_28 : f32 to vector<8x256xf32>
    %116 = arith.select %114, %110, %115 : vector<8x256xi1>, vector<8x256xf32>
    %cst_29 = arith.constant dense<0.000000e+00> : vector<256xf32>
    %117 = vector.multi_reduction <add>, %116, %cst_29 [0] : vector<8x256xf32> to vector<256xf32>
    %118 = vector.shape_cast %117 : vector<256xf32> to vector<1x256xf32>
    %cst_30 = arith.constant 0.000000e+00 : f32
    %119 = vector.broadcast %cst_30 : f32 to vector<1x256xf32>
    %120 = arith.subf %119, %118 : vector<1x256xf32>
    %cst_31 = arith.constant 0.000000e+00 : f32
    %121 = vector.broadcast %cst_31 : f32 to vector<1x256xf32>
    %122 = arith.select %13, %120, %121 : vector<1x256xi1>, vector<1x256xf32>
    %123 = vector.shape_cast %122 : vector<1x256xf32> to vector<1x1x256xf32>
    %cst_32 = arith.constant dense<0.000000e+00> : vector<1xf32>
    %124 = vector.multi_reduction <add>, %123, %cst_32 [1, 2] : vector<1x1x256xf32> to vector<1xf32>
    %125 = vector.shape_cast %124 : vector<1xf32> to vector<1x1x1xf32>
    %126 = vector.extract %125[0, 0, 0] : f32 from vector<1x1x1xf32>
    %127 = arith.addf %72, %126 : f32
    %128 = arith.extui %13 : vector<1x256xi1> to vector<1x256xi32>
    %129 = arith.sitofp %128 : vector<1x256xi32> to vector<1x256xf32>
    %130 = vector.shape_cast %129 : vector<1x256xf32> to vector<1x1x256xf32>
    %cst_33 = arith.constant dense<0.000000e+00> : vector<1xf32>
    %131 = vector.multi_reduction <add>, %130, %cst_33 [1, 2] : vector<1x1x256xf32> to vector<1xf32>
    %132 = vector.shape_cast %131 : vector<1xf32> to vector<1x1x1xf32>
    %133 = vector.extract %132[0, 0, 0] : f32 from vector<1x1x1xf32>
    %cst_34 = arith.constant 2.000000e+00 : f32
    %134 = arith.mulf %133, %cst_34 : f32
    %135 = arith.addf %57, %112 : vector<8x256xf32>
    %cst_35 = arith.constant 5.000000e-01 : f32
    %136 = vector.broadcast %cst_35 : f32 to vector<8x256xf32>
    %137 = arith.mulf %135, %136 : vector<8x256xf32>
    %cst_36 = arith.constant 9.99999968E-21 : f32
    %138 = vector.broadcast %cst_36 : f32 to vector<8x256xf32>
    %139 = arith.maximumf %137, %138 : vector<8x256xf32>
    %140 = math.log %139 : vector<8x256xf32>
    %141 = arith.mulf %137, %140 : vector<8x256xf32>
    %cst_37 = arith.constant dense<0.000000e+00> : vector<256xf32>
    %142 = vector.multi_reduction <add>, %141, %cst_37 [0] : vector<8x256xf32> to vector<256xf32>
    %143 = vector.shape_cast %142 : vector<256xf32> to vector<1x256xf32>
    %cst_38 = arith.constant 0.000000e+00 : f32
    %144 = vector.broadcast %cst_38 : f32 to vector<1x256xf32>
    %145 = arith.subf %144, %143 : vector<1x256xf32>
    %cst_39 = arith.constant 0.000000e+00 : f32
    %146 = vector.broadcast %cst_39 : f32 to vector<1x256xf32>
    %147 = arith.mulf %137, %55 : vector<8x256xf32>
    %cst_40 = arith.constant dense<0.000000e+00> : vector<256xf32>
    %148 = vector.multi_reduction <add>, %147, %cst_40 [0] : vector<8x256xf32> to vector<256xf32>
    %149 = vector.shape_cast %148 : vector<256xf32> to vector<1x256xf32>
    %150 = arith.subf %143, %149 : vector<1x256xf32>
    %151 = arith.addf %146, %150 : vector<1x256xf32>
    %152 = arith.mulf %137, %110 : vector<8x256xf32>
    %cst_41 = arith.constant dense<0.000000e+00> : vector<256xf32>
    %153 = vector.multi_reduction <add>, %152, %cst_41 [0] : vector<8x256xf32> to vector<256xf32>
    %154 = vector.shape_cast %153 : vector<256xf32> to vector<1x256xf32>
    %155 = arith.subf %143, %154 : vector<1x256xf32>
    %156 = arith.addf %151, %155 : vector<1x256xf32>
    %cst_42 = arith.constant 5.000000e-01 : f32
    %157 = vector.broadcast %cst_42 : f32 to vector<1x256xf32>
    %158 = arith.mulf %156, %157 : vector<1x256xf32>
    %cst_43 = arith.constant 1.000000e+00 : f32
    %159 = vector.broadcast %cst_43 : f32 to vector<1x256xf32>
    %160 = arith.mulf %159, %158 : vector<1x256xf32>
    %cst_44 = arith.constant 5.000000e-01 : f32
    %161 = vector.broadcast %cst_44 : f32 to vector<1x256xf32>
    %162 = arith.mulf %161, %145 : vector<1x256xf32>
    %163 = arith.addf %160, %162 : vector<1x256xf32>
    %164 = vector.shape_cast %163 : vector<1x256xf32> to vector<1x1x256xf32>
    %cst_45 = arith.constant dense<0.000000e+00> : vector<1xf32>
    %165 = vector.multi_reduction <add>, %164, %cst_45 [1, 2] : vector<1x1x256xf32> to vector<1xf32>
    %166 = vector.shape_cast %165 : vector<1xf32> to vector<1x1x1xf32>
    %167 = vector.extract %166[0, 0, 0] : f32 from vector<1x1x1xf32>
    %c0_46 = arith.constant 0 : index
    %168 = memref.load %arg8[%c0_46] : memref<3xf32, #tpu.memory_space<smem>>
    %169 = arith.addf %168, %127 : f32
    %c0_47 = arith.constant 0 : index
    %170 = memref.load %arg8[%c0_47] : memref<3xf32, #tpu.memory_space<smem>>
    memref.store %169, %arg8[%c0_47] : memref<3xf32, #tpu.memory_space<smem>>
    %c1_48 = arith.constant 1 : index
    %171 = memref.load %arg8[%c1_48] : memref<3xf32, #tpu.memory_space<smem>>
    %172 = arith.addf %171, %134 : f32
    %c1_49 = arith.constant 1 : index
    %173 = memref.load %arg8[%c1_49] : memref<3xf32, #tpu.memory_space<smem>>
    memref.store %172, %arg8[%c1_49] : memref<3xf32, #tpu.memory_space<smem>>
    %c2 = arith.constant 2 : index
    %174 = memref.load %arg8[%c2] : memref<3xf32, #tpu.memory_space<smem>>
    %175 = arith.addf %174, %167 : f32
    %c2_50 = arith.constant 2 : index
    %176 = memref.load %arg8[%c2_50] : memref<3xf32, #tpu.memory_space<smem>>
    memref.store %175, %arg8[%c2_50] : memref<3xf32, #tpu.memory_space<smem>>
    %177 = arith.extui %5 : i1 to i32
    %c0_i32_51 = arith.constant 0 : i32
    %178 = arith.cmpi ne, %177, %c0_i32_51 : i32
    scf.if %178 {
      %c0_52 = arith.constant 0 : index
      %179 = memref.load %arg8[%c0_52] : memref<3xf32, #tpu.memory_space<smem>>
      %c1_53 = arith.constant 1 : index
      %180 = memref.load %arg8[%c1_53] : memref<3xf32, #tpu.memory_space<smem>>
      %cst_54 = arith.constant 1.000000e+00 : f32
      %181 = arith.maximumf %180, %cst_54 : f32
      %182 = arith.divf %179, %181 : f32
      %cst_55 = arith.constant 5.000000e-01 : f32
      %183 = arith.mulf %182, %cst_55 : f32
      %c2_56 = arith.constant 2 : index
      %184 = memref.load %arg8[%c2_56] : memref<3xf32, #tpu.memory_space<smem>>
      %cst_57 = arith.constant 5.120000e+02 : f32
      %185 = arith.divf %184, %cst_57 : f32
      %186 = arith.addf %183, %185 : f32
      %c0_58 = arith.constant 0 : index
      %c0_59 = arith.constant 0 : index
      %187 = memref.load %arg7[%c0_58, %c0_59] : memref<1x1xf32, #tpu.memory_space<smem>>
      memref.store %186, %arg7[%c0_58, %c0_59] : memref<1x1xf32, #tpu.memory_space<smem>>
    } else {
    }
    return
  }
  func.func @transform_0(%arg0: i32, %arg1: i32) -> (i32, i32, i32, i32) {
    %c0_i32 = arith.constant 0 : i32
    %c0_i32_0 = arith.constant 0 : i32
    %c0_i32_1 = arith.constant 0 : i32
    return %c0_i32, %arg0, %c0_i32_0, %arg1 : i32, i32, i32, i32
  }
  func.func @transform_1(%arg0: i32, %arg1: i32) -> (i32, i32, i32) {
    %c0_i32 = arith.constant 0 : i32
    %c0_i32_0 = arith.constant 0 : i32
    return %arg0, %c0_i32, %arg1 : i32, i32, i32
  }
  func.func @transform_2(%arg0: i32, %arg1: i32) -> (i32, i32) {
    %c0_i32 = arith.constant 0 : i32
    %c0_i32_0 = arith.constant 0 : i32
    %c0_i32_1 = arith.constant 0 : i32
    return %c0_i32, %c0_i32_0 : i32, i32
  }
  func.func @transform_3(%arg0: i32, %arg1: i32) -> (i32, i32) {
    %c0_i32 = arith.constant 0 : i32
    %c0_i32_0 = arith.constant 0 : i32
    %c0_i32_1 = arith.constant 0 : i32
    return %c0_i32, %c0_i32_0 : i32, i32
  }
  func.func @transform_4(%arg0: i32, %arg1: i32) -> (i32, i32, i32) {
    %c0_i32 = arith.constant 0 : i32
    %c0_i32_0 = arith.constant 0 : i32
    return %arg0, %c0_i32, %arg1 : i32, i32, i32
  }
  func.func @transform_5(%arg0: i32, %arg1: i32) -> (i32, i32) {
    %c0_i32 = arith.constant 0 : i32
    %c0_i32_0 = arith.constant 0 : i32
    %c0_i32_1 = arith.constant 0 : i32
    return %c0_i32, %c0_i32_0 : i32, i32
  }
}

</mosaic_0001>

<llo_original>
// kernel: tpu_custom_call.1
$region0: #{tpu_custom_call.1}
  #allocation0 [shape = 'u32[]', space=smem, size = 0x4, offset = 0x4, fixed_abs, tag = 'smem constant byte address 0x4 - core index']
  #allocation1 [shape = 'u32[72,128]{1,0:T(1,128)}', space=vmem, size = 0x9000, scoped, tag = 'internal scratch']
  #allocation2 [shape = 'f32[3]{0:T(128)}', space=smem, size = 0x200, scoped, tag = 'scratch operand']
  %s0 = inlined_call_operand.hbm [shape: f32[2,2,4,256], index: 0, kind: input, shape index: {}]
  %s1 = inlined_call_operand.vmem [shape: s32[2,1,256], index: 1, kind: input, shape index: {}]
  %s2 = inlined_call_operand.vmem [shape: f32[8,4], index: 2, kind: input, shape index: {}]
  %s3 = inlined_call_operand.vmem [shape: f32[8,1], index: 3, kind: input, shape index: {}]
  %s4 = inlined_call_operand.hbm [shape: f32[2,8,256], index: 4, kind: output, shape index: {0}]
  %s5 = inlined_call_operand.hbm [shape: f32[1,1], index: 5, kind: output, shape index: {1}]
  %6 = xla_tuple %s4, %s5
  %s7 = sld [smem:[#allocation0]]
  $region69: #{tpu_custom_call.1} parent=0
    _
  %s9 = ssub.s32 1, %s7
  %s10 = scalar_select 0, %s9, %s7
  $region1: #{tpu_custom_call.1} parent=0
    #allocation3 [shape = 'u8[16384]{0}', space=vmem, size = 0x4000, scoped, tag = 'input window, operand 0']
    #allocation4 [shape = 's32[2]{0}', space=sflag, size = 0x8, scoped, tag = 'scoped memory for tpu_custom_call.1']
    #allocation5 [shape = 's32[2]{0}', space=sflag, size = 0x8, scoped, tag = 'scoped memory for tpu_custom_call.1']
    #allocation6 [shape = 's32[2]{0}', space=sflag, size = 0x8, scoped, tag = 'scoped memory for tpu_custom_call.1']
    #allocation7 [shape = 'u8[16384]{0}', space=vmem, size = 0x4000, scoped, tag = 'output window, operand 0']
    #allocation8 [shape = 'u8[512]{0}', space=smem, size = 0x200, scoped, tag = 'output window, operand 1, single buffered']
    %11 = vsyncpa [#allocation4], 0
    %s12 = scalar_lea.sflag [#allocation4], 1
    %13 = vsyncpa %s12, 0
    %14 = vsyncpa [#allocation5], 0
    %s15 = scalar_lea.sflag [#allocation5], 1
    %16 = vsyncpa %s15, 0
    %17 = vsyncpa [#allocation6], 0
    loop: start=0, step=1, limit=4
    $region2: #{tpu_custom_call.1} parent=1 // loop_pre_header
      _
    $region3: #{tpu_custom_call.1} parent=1 // loop_header
      %s19 = sphi 0, %s23
      %p20 = scmp.ge.s32.totalorder %s19, 4
      %s26 = sphi 0, %s38
      %s27 = sphi 0, %s34
      %s28 = sphi 0, %s26
      %s29 = sphi 0, %s27
      %s30 = sphi 0, %s28
      %s31 = sphi 0, %s29
      %s43 = sphi 0, %s45
      %s46 = sphi 0, %s43
      %s47 = sphi 0, %s46
      %s63 = sphi 0, %s47
      %s71 = sphi 0, %s73
      %s74 = sphi 0, %s71
      %s75 = sphi 0, %s74
      %s91 = sphi 0, %s75
      %s95 = sphi 0, %s95
      %s97 = sphi 0, %s95
      %s98 = sphi 0, %s97
      %s112 = sphi 0, %s98
      %s116 = sphi 0, %s116
      %s118 = sphi 0, %s116
      %s119 = sphi 0, %s118
      %s133 = sphi 0, %s119
      %s141 = sphi 0, %s143
      %s144 = sphi 0, %s141
      %s145 = sphi 0, %s144
      %s161 = sphi 0, %s145
      %s165 = sphi 0, %s165
      %s167 = sphi 0, %s165
      %s168 = sphi 0, %s167
      %s182 = sphi 0, %s168
    $region4: #{tpu_custom_call.1} parent=1 // loop_header_branch
      %22 = sbr.rel (%p20) target = $region8
    $region5: #{tpu_custom_call.1} parent=1 // loop_body
      %s24 = ssub.s32 %s19, 1
      %s25 = ssub.s32 %s19, 2
      %s32 = sadd.s32 1, %s27
      %p33 = scmp.ge.s32.totalorder %s32, 1
      %s34 = scalar_select %p33, 0, %s32
      %s35 = sadd.s32 1, %s26
      %s36 = scalar_select %p33, %s35, %s26
      %p37 = scmp.ge.s32.totalorder %s36, 2
      %s38 = scalar_select %p37, 0, %s36
      %s39 = ssub.s32 %s26, %s38
      %s40 = ssub.s32 %s27, %s34
      %s41 = sor.u32 %s39, %s40
      %p42 = scmp.eq.s32.totalorder %s41, 0
      %s44 = sadd.s32 %s43, 1
      %s45 = scalar_select %p42, %s43, %s44
      %p48 = pneg %p42
      %p49 = scmp.eq.s32.totalorder %s19, 1
      %p50 = por %p48, %p49
      %p51 = scmp.ne.s32.totalorder %s43, %s46
      %p52 = scmp.eq.s32.totalorder %s19, 0
      %p53 = por %p51, %p52
      %p54 = scmp.ne.s32.totalorder %s43, %s46
      %p55 = scmp.eq.s32.totalorder %s24, 1
      %p56 = por %p54, %p55
      %p57 = scmp.ne.s32.totalorder %s46, %s47
      %p58 = scmp.eq.s32.totalorder %s24, 0
      %p59 = por %p57, %p58
      %p60 = scmp.ne.s32.totalorder %s46, %s47
      %p61 = scmp.eq.s32.totalorder %s25, 1
      %p62 = por %p60, %p61
      %p64 = scmp.ne.s32.totalorder %s47, %s63
      %p65 = scmp.eq.s32.totalorder %s25, 0
      %p66 = por %p64, %p65
      %s67 = ssub.s32 %s26, %s38
      %s68 = ssub.s32 %s27, %s34
      %s69 = sor.u32 %s67, %s68
      %p70 = scmp.eq.s32.totalorder %s69, 0
      %s72 = sadd.s32 %s71, 1
      %s73 = scalar_select %p70, %s71, %s72
      %p76 = pneg %p70
      %p77 = scmp.eq.s32.totalorder %s19, 1
      %p78 = por %p76, %p77
      %p79 = scmp.ne.s32.totalorder %s71, %s74
      %p80 = scmp.eq.s32.totalorder %s19, 0
      %p81 = por %p79, %p80
      %p82 = scmp.ne.s32.totalorder %s71, %s74
      %p83 = scmp.eq.s32.totalorder %s24, 1
      %p84 = por %p82, %p83
      %p85 = scmp.ne.s32.totalorder %s74, %s75
      %p86 = scmp.eq.s32.totalorder %s24, 0
      %p87 = por %p85, %p86
      %p88 = scmp.ne.s32.totalorder %s74, %s75
      %p89 = scmp.eq.s32.totalorder %s25, 1
      %p90 = por %p88, %p89
      %p92 = scmp.ne.s32.totalorder %s75, %s91
      %p93 = scmp.eq.s32.totalorder %s25, 0
      %p94 = por %p92, %p93
      %s96 = sadd.s32 %s95, 1
      %p99 = scmp.eq.s32.totalorder %s19, 1
      %p100 = scmp.ne.s32.totalorder %s95, %s97
      %p101 = scmp.eq.s32.totalorder %s19, 0
      %p102 = por %p100, %p101
      %p103 = scmp.ne.s32.totalorder %s95, %s97
      %p104 = scmp.eq.s32.totalorder %s24, 1
      %p105 = por %p103, %p104
      %p106 = scmp.ne.s32.totalorder %s97, %s98
      %p107 = scmp.eq.s32.totalorder %s24, 0
      %p108 = por %p106, %p107
      %p109 = scmp.ne.s32.totalorder %s97, %s98
      %p110 = scmp.eq.s32.totalorder %s25, 1
      %p111 = por %p109, %p110
      %p113 = scmp.ne.s32.totalorder %s98, %s112
      %p114 = scmp.eq.s32.totalorder %s25, 0
      %p115 = por %p113, %p114
      %s117 = sadd.s32 %s116, 1
      %p120 = scmp.eq.s32.totalorder %s19, 1
      %p121 = scmp.ne.s32.totalorder %s116, %s118
      %p122 = scmp.eq.s32.totalorder %s19, 0
      %p123 = por %p121, %p122
      %p124 = scmp.ne.s32.totalorder %s116, %s118
      %p125 = scmp.eq.s32.totalorder %s24, 1
      %p126 = por %p124, %p125
      %p127 = scmp.ne.s32.totalorder %s118, %s119
      %p128 = scmp.eq.s32.totalorder %s24, 0
      %p129 = por %p127, %p128
      %p130 = scmp.ne.s32.totalorder %s118, %s119
      %p131 = scmp.eq.s32.totalorder %s25, 1
      %p132 = por %p130, %p131
      %p134 = scmp.ne.s32.totalorder %s119, %s133
      %p135 = scmp.eq.s32.totalorder %s25, 0
      %p136 = por %p134, %p135
      %s137 = ssub.s32 %s26, %s38
      %s138 = ssub.s32 %s27, %s34
      %s139 = sor.u32 %s137, %s138
      %p140 = scmp.eq.s32.totalorder %s139, 0
      %s142 = sadd.s32 %s141, 1
      %s143 = scalar_select %p140, %s141, %s142
      %p146 = pneg %p140
      %p147 = scmp.eq.s32.totalorder %s19, 1
      %p148 = por %p146, %p147
      %p149 = scmp.ne.s32.totalorder %s141, %s144
      %p150 = scmp.eq.s32.totalorder %s19, 0
      %p151 = por %p149, %p150
      %p152 = scmp.ne.s32.totalorder %s141, %s144
      %p153 = scmp.eq.s32.totalorder %s24, 1
      %p154 = por %p152, %p153
      %p155 = scmp.ne.s32.totalorder %s144, %s145
      %p156 = scmp.eq.s32.totalorder %s24, 0
      %p157 = por %p155, %p156
      %p158 = scmp.ne.s32.totalorder %s144, %s145
      %p159 = scmp.eq.s32.totalorder %s25, 1
      %p160 = por %p158, %p159
      %p162 = scmp.ne.s32.totalorder %s145, %s161
      %p163 = scmp.eq.s32.totalorder %s25, 0
      %p164 = por %p162, %p163
      %s166 = sadd.s32 %s165, 1
      %p169 = scmp.eq.s32.totalorder %s19, 1
      %p170 = scmp.ne.s32.totalorder %s165, %s167
      %p171 = scmp.eq.s32.totalorder %s19, 0
      %p172 = por %p170, %p171
      %p173 = scmp.ne.s32.totalorder %s165, %s167
      %p174 = scmp.eq.s32.totalorder %s24, 1
      %p175 = por %p173, %p174
      %p176 = scmp.ne.s32.totalorder %s167, %s168
      %p177 = scmp.eq.s32.totalorder %s24, 0
      %p178 = por %p176, %p177
      %p179 = scmp.ne.s32.totalorder %s167, %s168
      %p180 = scmp.eq.s32.totalorder %s25, 1
      %p181 = por %p179, %p180
      %p183 = scmp.ne.s32.totalorder %s168, %s182
      %p184 = scmp.eq.s32.totalorder %s25, 0
      %p185 = por %p183, %p184
      %p186 = scmp.le.s32.totalorder 1, %s19
      %p187 = scmp.lt.s32.totalorder %s19, 3
      %p188 = pnand %p186, %p187
      %p189 = pneg %p188
      // Predicated region
      $region9: #{tpu_custom_call.1} parent=5 // pred_check
        _
      $region10: #{tpu_custom_call.1} parent=5 // pred_check_branch
        %191 = sbr.rel (%p188) target = $region12
      $region11: #{tpu_custom_call.1} parent=5 // pred_region
        %s192 = ssub.s32 %s19, 1
        // Predicated region
        $region13: #{tpu_custom_call.1} parent=11 // pred_check
          %p193 = pneg %p108
        $region14: #{tpu_custom_call.1} parent=11 // pred_check_branch
          %195 = sbr.rel (%p193) target = $region16
        $region15: #{tpu_custom_call.1} parent=11 // pred_region
          _
        $region16: #{tpu_custom_call.1} parent=11 // pred_fallthru
          _
        // Predicated region
        $region17: #{tpu_custom_call.1} parent=11 // pred_check
          %p196 = pneg %p129
        $region18: #{tpu_custom_call.1} parent=11 // pred_check_branch
          %198 = sbr.rel (%p196) target = $region20
        $region19: #{tpu_custom_call.1} parent=11 // pred_region
          _
        $region20: #{tpu_custom_call.1} parent=11 // pred_fallthru
          _
      $region12: #{tpu_custom_call.1} parent=5 // pred_fallthru
        _
      %p199 = scmp.lt.s32.totalorder %s19, 2
      // Predicated region
      $region21: #{tpu_custom_call.1} parent=5 // pred_check
        %p200 = pneg %p199
      $region22: #{tpu_custom_call.1} parent=5 // pred_check_branch
        %202 = sbr.rel (%p200) target = $region24
      $region23: #{tpu_custom_call.1} parent=5 // pred_region
        // Predicated region
        $region25: #{tpu_custom_call.1} parent=23 // pred_check
          %p203 = pneg %p53
        $region26: #{tpu_custom_call.1} parent=23 // pred_check_branch
          %205 = sbr.rel (%p203) target = $region28
        $region27: #{tpu_custom_call.1} parent=23 // pred_region
          %s206 = sand.u32 %s43, 1
          %s207 = scalar_lea.sflag [#allocation4], %s206
          %s208 = sand.u32 %s43, 1
          %s209 = smul.addr %s208, 16
          %s210 = scalar_lea.vmem [#allocation3], %s209
          %s211 = smul.u32 2, %s27
          %213 = vsyncadd %s207, 0
          %s214 = smul.addr %s26, 2
          %s215 = sadd.s32 %s211, %s214
          %s216 = smul.addr %s215, 4
          %s217 = scalar_lea.hbm %s0, %s216
          %s218 = sshll.u32 %s217, 4
          %s219 = int_to_ptr.hbm [resolvable:$true] %s218
          %s220 = sshll.u32 %s210, 4
          %s221 = int_to_ptr.vmem [resolvable:$true] %s220
          %226 = dma.hbm_to_vmem [thread:$0]  %s219, 256, %s221, %s207, 256, 128, 8
        $region28: #{tpu_custom_call.1} parent=23 // pred_fallthru
          _
        // Predicated region
        $region29: #{tpu_custom_call.1} parent=23 // pred_check
          %p227 = pneg %p81
        $region30: #{tpu_custom_call.1} parent=23 // pred_check_branch
          %229 = sbr.rel (%p227) target = $region32
        $region31: #{tpu_custom_call.1} parent=23 // pred_region
          %s230 = smul.u32 2, %s27
          %p231 = scmp.lt.s32.totalorder %s26, 1
          %s232 = scalar_select %p231, %s26, 1
          %p233 = scmp.lt.s32.totalorder %s230, 1
          %s234 = scalar_select %p233, %s230, 1
          %s235 = smul.addr %s232, 2
          %s236 = sadd.s32 %s234, %s235
          %s237 = scalar_lea.vmem %s1, %s236
          %s238 = smul.u32 2, %s27
        $region32: #{tpu_custom_call.1} parent=23 // pred_fallthru
          _
      $region24: #{tpu_custom_call.1} parent=5 // pred_fallthru
        _
      %p239 = scmp.le.s32.totalorder 1, %s19
      %p240 = scmp.lt.s32.totalorder %s19, 3
      %p241 = pnand %p239, %p240
      %p242 = pneg %p241
      // Predicated region
      $region33: #{tpu_custom_call.1} parent=5 // pred_check
        _
      $region34: #{tpu_custom_call.1} parent=5 // pred_check_branch
        %244 = sbr.rel (%p241) target = $region36
      $region35: #{tpu_custom_call.1} parent=5 // pred_region
        %s245 = ssub.s32 %s19, 1
        %s246 = sand.u32 %s46, 1
        %s247 = scalar_lea.sflag [#allocation4], %s246
        %s248 = sand.u32 %s46, 1
        %s249 = smul.addr %s248, 16
        %s250 = scalar_lea.vmem [#allocation3], %s249
        // Predicated region
        $region37: #{tpu_custom_call.1} parent=35 // pred_check
          %p251 = pneg %p59
        $region38: #{tpu_custom_call.1} parent=35 // pred_check_branch
          %253 = sbr.rel (%p251) target = $region40
        $region39: #{tpu_custom_call.1} parent=35 // pred_region
          %255 = dma.done %s247, 256
        $region40: #{tpu_custom_call.1} parent=35 // pred_fallthru
          _
        %s256 = sand.u32 %s46, 1
        %s257 = scalar_lea.sflag [#allocation4], %s256
        %s258 = sand.u32 %s46, 1
        %s259 = smul.addr %s258, 16
        %s260 = scalar_lea.vmem [#allocation3], %s259
        %p261 = pneg %p59
        %p262 = pneg %p56
        %s263 = smul.u32 2, %s29
        %p264 = scmp.lt.s32.totalorder %s28, 1
        %s265 = scalar_select %p264, %s28, 1
        %p266 = scmp.lt.s32.totalorder %s263, 1
        %s267 = scalar_select %p266, %s263, 1
        %s268 = smul.addr %s265, 2
        %s269 = sadd.s32 %s267, %s268
        %s270 = scalar_lea.vmem %s1, %s269
        %p271 = pneg %p87
        %p272 = pneg %p84
        %p273 = pneg %p108
        %p274 = pneg %p105
        %p275 = pneg %p129
        %p276 = pneg %p126
        %p277 = pneg %p157
        %p278 = pneg %p154
        %s279 = sand.u32 %s144, 1
        %s280 = scalar_lea.sflag [#allocation5], %s279
        %s281 = sand.u32 %s144, 1
        %s282 = smul.addr %s281, 16
        %s283 = scalar_lea.vmem [#allocation7], %s282
        %p284 = pneg %p178
        %p285 = pneg %p175
        %s286 = smul.u32 2, %s29
        %s287 = smul.u32 2, %s29
        %p288 = scmp.lt.s32.totalorder %s28, 1
        %s289 = scalar_select %p288, %s28, 1
        %p290 = scmp.lt.s32.totalorder %s287, 1
        %s291 = scalar_select %p290, %s287, 1
        %s292 = smul.addr %s289, 2
        %s293 = sadd.s32 %s291, %s292
        %s294 = scalar_lea.vmem %s1, %s293
        %s295 = smul.u32 2, %s29
        %s296 = smul.u32 2, %s29
        %p297 = scmp.eq.s32.totalorder %s28, 0
        %p298 = scmp.eq.s32.totalorder %s29, 0
        %p299 = pnand %p297, %p298
        %p300 = pneg %p299
        %p301 = scmp.eq.s32.totalorder %s28, 1
        %p302 = pnand %p301, %p298
        %p303 = pneg %p302
        // Predicated region
        $region41: #{tpu_custom_call.1} parent=35 // pred_check
          _
        $region42: #{tpu_custom_call.1} parent=35 // pred_check_branch
          %305 = sbr.rel (%p299) target = $region44
        $region43: #{tpu_custom_call.1} parent=35 // pred_region
          %s306 = scalar_lea.smem [#allocation2], 0
          %307 = sst [smem:[%s306]] 0.0
          %s308 = scalar_lea.smem [#allocation2], 1
          %309 = sst [smem:[%s308]] 0.0
          %s310 = scalar_lea.smem [#allocation2], 2
          %311 = sst [smem:[%s310]] 0.0
        $region44: #{tpu_custom_call.1} parent=35 // pred_fallthru
          _
        %v312 = vld [vmem:[%s2] sm:$0xff]
        %v313 = vld [vmem:[%s3] sm:$0xff]
        %v314 = vld [vmem:[%s294] sm:$0x3]
        %vm315 = vcmp.ne.s32.totalorder %v314, 4294967295
        %v316 = vlaneseq
        %v317 = vshrl.u32 %v316, 7
        %v318 = vld [vmem:[%s250] sm:$0xff]
        %320 = vset.pattern.permute.xlu0 0
        %321 = vperm.xlu0 %320, %v312
        %v322 = vpop.permute.xlu0 %321
        %v325 = vperm.slane %v318, 0
        %v326 = vperm.slane %v318, 4
        %v329 = vperm.slane %v325, 0
        %v330 = vperm.slane %v326, 0
        %v331 = vmul.f32 %v322, %v329
        %v332 = vmul.f32 %v322, %v330
        %334 = vset.pattern.permute.xlu0 0
        %335 = vperm.xlu0 %334, %v313
        %v336 = vpop.permute.xlu0 %335
        %v338 = vadd.f32 %v336, %v331
        %v339 = vadd.f32 %v336, %v332
        %340 = vset.pattern.permute.xlu0 1
        %341 = vperm.xlu0 %340, %v312
        %v342 = vpop.permute.xlu0 %341
        %v344 = vperm.slane %v318, 1
        %v345 = vperm.slane %v318, 5
        %v348 = vperm.slane %v344, 1
        %v349 = vperm.slane %v345, 1
        %v350 = vmul.f32 %v342, %v348
        %v351 = vmul.f32 %v342, %v349
        %v352 = vadd.f32 %v338, %v350
        %v353 = vadd.f32 %v339, %v351
        %354 = vset.pattern.permute.xlu0 2
        %355 = vperm.xlu0 %354, %v312
        %v356 = vpop.permute.xlu0 %355
        %v358 = vperm.slane %v318, 2
        %v359 = vperm.slane %v318, 6
        %v362 = vperm.slane %v358, 2
        %v363 = vperm.slane %v359, 2
        %v364 = vmul.f32 %v356, %v362
        %v365 = vmul.f32 %v356, %v363
        %v366 = vadd.f32 %v352, %v364
        %v367 = vadd.f32 %v353, %v365
        %368 = vset.pattern.permute.xlu0 3
        %369 = vperm.xlu0 %368, %v312
        %v370 = vpop.permute.xlu0 %369
        %v372 = vperm.slane %v318, 3
        %v373 = vperm.slane %v318, 7
        %v376 = vperm.slane %v372, 3
        %v377 = vperm.slane %v373, 3
        %v378 = vmul.f32 %v370, %v376
        %v379 = vmul.f32 %v370, %v377
        %v380 = vadd.f32 %v366, %v378
        %v381 = vadd.f32 %v367, %v379
        %382 = vst [vmem:[%s283] sm:$0xff] %v380
        %383 = vst [vmem:[%s283 + $0x8] sm:$0xff] %v381
        %v384 = vrot.slane %v380, 4
        %v385 = vmax.f32 %v380, %v384
        %v386 = vrot.slane %v385, 2
        %v387 = vmax.f32 %v385, %v386
        %v388 = vrot.slane %v387, 1
        %v389 = vmax.f32 %v387, %v388
        %v390 = vrot.slane %v381, 4
        %v391 = vmax.f32 %v381, %v390
        %v392 = vrot.slane %v391, 2
        %v393 = vmax.f32 %v391, %v392
        %v394 = vrot.slane %v393, 1
        %v395 = vmax.f32 %v393, %v394
        %v396 = vsub.f32 %v380, %v389
        %v397 = vsub.f32 %v381, %v395
        %v398 = vmul.f32 %v396, 1.442695
        %v399 = vpow.pop %v398
        %v400 = vmul.f32 %v397, 1.442695
        %v401 = vpow.pop %v400
        %v402 = vrot.slane %v399, 4
        %v403 = vadd.f32 %v399, %v402
        %v404 = vrot.slane %v403, 2
        %v405 = vadd.f32 %v403, %v404
        %v406 = vrot.slane %v405, 1
        %v407 = vadd.f32 %v405, %v406
        %v408 = vrot.slane %v401, 4
        %v409 = vadd.f32 %v401, %v408
        %v410 = vrot.slane %v409, 2
        %v411 = vadd.f32 %v409, %v410
        %v412 = vrot.slane %v411, 1
        %v413 = vadd.f32 %v411, %v412
        %v414 = vlog2.pop %v407
        %v415 = vmul.f32 %v414, 0.6931472
        %v416 = vlog2.pop %v413
        %v417 = vmul.f32 %v416, 0.6931472
        %v418 = vadd.f32 %v415, %v389
        %v419 = vadd.f32 %v417, %v395
        %v420 = vsub.f32 %v380, %v418
        %v421 = vsub.f32 %v381, %v419
        %v422 = vrcp.pop %v407
        %v423 = vmul.f32 %v407, %v422
        %v424 = vsub.f32 1.0, %v423
        %v425 = vmul.f32 %v422, %v424
        %v426 = vadd.f32 %v422, %v425
        %vm427 = vweird.f32 %v407
        %vm428 = vweird.f32 %v422
        %vm429 = vmor %vm427, %vm428
        %v430 = vsel %vm429, %v422, %v426
        %v431 = vand.u32 2147483647, %v407
        %vm432 = vcmp.eq.f32.partialorder %v431, 8.507059e+37
        %v433 = vand.u32 %v407, 2147483648
        %v434 = vor.u32 1.1754944e-38, %v433
        %v435 = vsel %vm432, %v434, %v430
        %v436 = vmul.f32 %v399, %v435
        %v437 = vrcp.pop %v413
        %v438 = vmul.f32 %v413, %v437
        %v439 = vsub.f32 1.0, %v438
        %v440 = vmul.f32 %v437, %v439
        %v441 = vadd.f32 %v437, %v440
        %vm442 = vweird.f32 %v413
        %vm443 = vweird.f32 %v437
        %vm444 = vmor %vm442, %vm443
        %v445 = vsel %vm444, %v437, %v441
        %v446 = vand.u32 2147483647, %v413
        %vm447 = vcmp.eq.f32.partialorder %v446, 8.507059e+37
        %v448 = vand.u32 %v413, 2147483648
        %v449 = vor.u32 1.1754944e-38, %v448
        %v450 = vsel %vm447, %v449, %v445
        %v451 = vmul.f32 %v401, %v450
        %v452 = vperm.slane %v314, 0
        %v453 = vperm.slane %v314, 1
        %vm454 = vcmp.eq.s32.totalorder %v317, %v452
        %vm455 = vcmp.eq.s32.totalorder %v317, %v453
        %v456 = vsel %vm454, %v420, 0.0
        %v457 = vsel %vm455, %v421, 0.0
        %v458 = vrot.slane %v456, 4
        %v459 = vadd.f32 %v456, %v458
        %v460 = vrot.slane %v459, 2
        %v461 = vadd.f32 %v459, %v460
        %v462 = vrot.slane %v461, 1
        %v463 = vadd.f32 %v461, %v462
        %v464 = vrot.slane %v457, 4
        %v465 = vadd.f32 %v457, %v464
        %v466 = vrot.slane %v465, 2
        %v467 = vadd.f32 %v465, %v466
        %v468 = vrot.slane %v467, 1
        %v469 = vadd.f32 %v467, %v468
        %v470 = vsub.f32 0.0, %v463
        %v471 = vsub.f32 0.0, %v469
        %v474 = vrot.slane %v471, 7
        %vm475 = vcmask 1040384
        %v476 = vsel %vm475, %v470, %v474
        %v478 = vsel %vm315, %v476, 0.0
        %v480 = vperm.slane %v478, 0
        %v481 = vperm.slane %v478, 1
        %v484 = vsel %vm475, %v480, 0.0
        %v485 = vsel %vm475, %v481, 0.0
        %v486 = vadd.f32 %v484, %v485
        %487 = vadd.xlane.f32.xlu0 %v486
        %v488 = vpop.xlane.xlu0 %487
        %v489 = vrot.slane %v488, 4
        %v490 = vadd.f32 %v488, %v489
        %v491 = vrot.slane %v490, 2
        %v492 = vadd.f32 %v490, %v491
        %v493 = vrot.slane %v492, 1
        %v494 = vadd.f32 %v492, %v493
        %s495 = vtos %v494
        %s496 = sadd.f32 %s495, 0.0
        %s497 = scalar_lea.vmem %s250, 8 [#allocation3]
        %v498 = vld [vmem:[%s497] sm:$0xff]
        %v500 = vperm.slane %v498, 0
        %v501 = vperm.slane %v498, 4
        %v504 = vperm.slane %v500, 0
        %v505 = vperm.slane %v501, 0
        %v506 = vmul.f32 %v322, %v504
        %v507 = vmul.f32 %v322, %v505
        %v508 = vadd.f32 %v336, %v506
        %v509 = vadd.f32 %v336, %v507
        %v510 = vperm.slane %v498, 1
        %v511 = vperm.slane %v498, 5
        %v514 = vperm.slane %v510, 1
        %v515 = vperm.slane %v511, 1
        %v516 = vmul.f32 %v342, %v514
        %v517 = vmul.f32 %v342, %v515
        %v518 = vadd.f32 %v508, %v516
        %v519 = vadd.f32 %v509, %v517
        %v520 = vperm.slane %v498, 2
        %v521 = vperm.slane %v498, 6
        %v524 = vperm.slane %v520, 2
        %v525 = vperm.slane %v521, 2
        %v526 = vmul.f32 %v356, %v524
        %v527 = vmul.f32 %v356, %v525
        %v528 = vadd.f32 %v518, %v526
        %v529 = vadd.f32 %v519, %v527
        %v530 = vperm.slane %v498, 3
        %v531 = vperm.slane %v498, 7
        %v534 = vperm.slane %v530, 3
        %v535 = vperm.slane %v531, 3
        %v536 = vmul.f32 %v370, %v534
        %v537 = vmul.f32 %v370, %v535
        %v538 = vadd.f32 %v528, %v536
        %v539 = vadd.f32 %v529, %v537
        %v540 = vrot.slane %v538, 4
        %v541 = vmax.f32 %v538, %v540
        %v542 = vrot.slane %v541, 2
        %v543 = vmax.f32 %v541, %v542
        %v544 = vrot.slane %v543, 1
        %v545 = vmax.f32 %v543, %v544
        %v546 = vrot.slane %v539, 4
        %v547 = vmax.f32 %v539, %v546
        %v548 = vrot.slane %v547, 2
        %v549 = vmax.f32 %v547, %v548
        %v550 = vrot.slane %v549, 1
        %v551 = vmax.f32 %v549, %v550
        %v552 = vsub.f32 %v538, %v545
        %v553 = vsub.f32 %v539, %v551
        %v554 = vmul.f32 %v552, 1.442695
        %v555 = vpow.pop %v554
        %v556 = vmul.f32 %v553, 1.442695
        %v557 = vpow.pop %v556
        %v558 = vrot.slane %v555, 4
        %v559 = vadd.f32 %v555, %v558
        %v560 = vrot.slane %v559, 2
        %v561 = vadd.f32 %v559, %v560
        %v562 = vrot.slane %v561, 1
        %v563 = vadd.f32 %v561, %v562
        %v564 = vrot.slane %v557, 4
        %v565 = vadd.f32 %v557, %v564
        %v566 = vrot.slane %v565, 2
        %v567 = vadd.f32 %v565, %v566
        %v568 = vrot.slane %v567, 1
        %v569 = vadd.f32 %v567, %v568
        %v570 = vlog2.pop %v563
        %v571 = vmul.f32 %v570, 0.6931472
        %v572 = vlog2.pop %v569
        %v573 = vmul.f32 %v572, 0.6931472
        %v574 = vadd.f32 %v571, %v545
        %v575 = vadd.f32 %v573, %v551
        %v576 = vsub.f32 %v538, %v574
        %v577 = vsub.f32 %v539, %v575
        %v578 = vrcp.pop %v563
        %v579 = vmul.f32 %v563, %v578
        %v580 = vsub.f32 1.0, %v579
        %v581 = vmul.f32 %v578, %v580
        %v582 = vadd.f32 %v578, %v581
        %vm583 = vweird.f32 %v563
        %vm584 = vweird.f32 %v578
        %vm585 = vmor %vm583, %vm584
        %v586 = vsel %vm585, %v578, %v582
        %v587 = vand.u32 2147483647, %v563
        %vm588 = vcmp.eq.f32.partialorder %v587, 8.507059e+37
        %v589 = vand.u32 %v563, 2147483648
        %v590 = vor.u32 1.1754944e-38, %v589
        %v591 = vsel %vm588, %v590, %v586
        %v592 = vmul.f32 %v555, %v591
        %v593 = vrcp.pop %v569
        %v594 = vmul.f32 %v569, %v593
        %v595 = vsub.f32 1.0, %v594
        %v596 = vmul.f32 %v593, %v595
        %v597 = vadd.f32 %v593, %v596
        %vm598 = vweird.f32 %v569
        %vm599 = vweird.f32 %v593
        %vm600 = vmor %vm598, %vm599
        %v601 = vsel %vm600, %v593, %v597
        %v602 = vand.u32 2147483647, %v569
        %vm603 = vcmp.eq.f32.partialorder %v602, 8.507059e+37
        %v604 = vand.u32 %v569, 2147483648
        %v605 = vor.u32 1.1754944e-38, %v604
        %v606 = vsel %vm603, %v605, %v601
        %v607 = vmul.f32 %v557, %v606
        %v608 = vsel %vm454, %v576, 0.0
        %v609 = vsel %vm455, %v577, 0.0
        %v610 = vrot.slane %v608, 4
        %v611 = vadd.f32 %v608, %v610
        %v612 = vrot.slane %v611, 2
        %v613 = vadd.f32 %v611, %v612
        %v614 = vrot.slane %v613, 1
        %v615 = vadd.f32 %v613, %v614
        %v616 = vrot.slane %v609, 4
        %v617 = vadd.f32 %v609, %v616
        %v618 = vrot.slane %v617, 2
        %v619 = vadd.f32 %v617, %v618
        %v620 = vrot.slane %v619, 1
        %v621 = vadd.f32 %v619, %v620
        %v622 = vsub.f32 0.0, %v615
        %v623 = vsub.f32 0.0, %v621
        %v626 = vrot.slane %v623, 7
        %v627 = vsel %vm475, %v622, %v626
        %v629 = vsel %vm315, %v627, 0.0
        %v631 = vperm.slane %v629, 0
        %v632 = vperm.slane %v629, 1
        %v635 = vsel %vm475, %v631, 0.0
        %v636 = vsel %vm475, %v632, 0.0
        %v637 = vadd.f32 %v635, %v636
        %638 = vadd.xlane.f32.xlu0 %v637
        %v639 = vpop.xlane.xlu0 %638
        %v640 = vrot.slane %v639, 4
        %v641 = vadd.f32 %v639, %v640
        %v642 = vrot.slane %v641, 2
        %v643 = vadd.f32 %v641, %v642
        %v644 = vrot.slane %v643, 1
        %v645 = vadd.f32 %v643, %v644
        %s646 = vtos %v645
        %s647 = sadd.f32 %s496, %s646
        %v648 = vsel %vm315, 1, 0
        %v649 = vcvt.s32.f32 %v648
        %v651 = vperm.slane %v649, 0
        %v652 = vperm.slane %v649, 1
        %v655 = vsel %vm475, %v651, 0.0
        %v656 = vsel %vm475, %v652, 0.0
        %v657 = vadd.f32 %v655, %v656
        %658 = vadd.xlane.f32.xlu0 %v657
        %v659 = vpop.xlane.xlu0 %658
        %v660 = vrot.slane %v659, 4
        %v661 = vadd.f32 %v659, %v660
        %v662 = vrot.slane %v661, 2
        %v663 = vadd.f32 %v661, %v662
        %v664 = vrot.slane %v663, 1
        %v665 = vadd.f32 %v663, %v664
        %s666 = vtos %v665
        %s667 = smul.f32 %s666, 2.0
        %v668 = vadd.f32 %v436, %v592
        %v669 = vadd.f32 %v451, %v607
        %v670 = vmul.f32 %v668, 0.5
        %v671 = vmul.f32 %v669, 0.5
        %v672 = vmax.f32 %v670, 1e-20
        %v673 = vmax.f32 %v671, 1e-20
        %v674 = vlog2.pop %v672
        %v675 = vmul.f32 %v674, 0.6931472
        %v676 = vlog2.pop %v673
        %v677 = vmul.f32 %v676, 0.6931472
        %v678 = vmul.f32 %v670, %v675
        %v679 = vmul.f32 %v671, %v677
        %v680 = vrot.slane %v678, 4
        %v681 = vadd.f32 %v678, %v680
        %v682 = vrot.slane %v681, 2
        %v683 = vadd.f32 %v681, %v682
        %v684 = vrot.slane %v683, 1
        %v685 = vadd.f32 %v683, %v684
        %v686 = vrot.slane %v679, 4
        %v687 = vadd.f32 %v679, %v686
        %v688 = vrot.slane %v687, 2
        %v689 = vadd.f32 %v687, %v688
        %v690 = vrot.slane %v689, 1
        %v691 = vadd.f32 %v689, %v690
        %v692 = vsub.f32 0.0, %v685
        %v693 = vsub.f32 0.0, %v691
        %v694 = vmul.f32 %v670, %v420
        %v695 = vmul.f32 %v671, %v421
        %v696 = vrot.slane %v694, 4
        %v697 = vadd.f32 %v694, %v696
        %v698 = vrot.slane %v697, 2
        %v699 = vadd.f32 %v697, %v698
        %v700 = vrot.slane %v699, 1
        %v701 = vadd.f32 %v699, %v700
        %v702 = vrot.slane %v695, 4
        %v703 = vadd.f32 %v695, %v702
        %v704 = vrot.slane %v703, 2
        %v705 = vadd.f32 %v703, %v704
        %v706 = vrot.slane %v705, 1
        %v707 = vadd.f32 %v705, %v706
        %v708 = vsub.f32 %v685, %v701
        %v709 = vsub.f32 %v691, %v707
        %v710 = vadd.f32 %v708, 0.0
        %v711 = vadd.f32 %v709, 0.0
        %v712 = vmul.f32 %v670, %v576
        %v713 = vmul.f32 %v671, %v577
        %v714 = vrot.slane %v712, 4
        %v715 = vadd.f32 %v712, %v714
        %v716 = vrot.slane %v715, 2
        %v717 = vadd.f32 %v715, %v716
        %v718 = vrot.slane %v717, 1
        %v719 = vadd.f32 %v717, %v718
        %v720 = vrot.slane %v713, 4
        %v721 = vadd.f32 %v713, %v720
        %v722 = vrot.slane %v721, 2
        %v723 = vadd.f32 %v721, %v722
        %v724 = vrot.slane %v723, 1
        %v725 = vadd.f32 %v723, %v724
        %v726 = vsub.f32 %v685, %v719
        %v727 = vsub.f32 %v691, %v725
        %v728 = vadd.f32 %v710, %v726
        %v729 = vadd.f32 %v711, %v727
        %v730 = vmul.f32 %v728, 0.5
        %v731 = vmul.f32 %v729, 0.5
        %v732 = vmul.f32 %v692, 0.5
        %v733 = vmul.f32 %v693, 0.5
        %v734 = vadd.f32 %v730, %v732
        %v735 = vadd.f32 %v731, %v733
        %v736 = vsel %vm475, %v734, 0.0
        %v737 = vsel %vm475, %v735, 0.0
        %v738 = vadd.f32 %v736, %v737
        %739 = vadd.xlane.f32.xlu0 %v738
        %v740 = vpop.xlane.xlu0 %739
        %v741 = vrot.slane %v740, 4
        %v742 = vadd.f32 %v740, %v741
        %v743 = vrot.slane %v742, 2
        %v744 = vadd.f32 %v742, %v743
        %v745 = vrot.slane %v744, 1
        %v746 = vadd.f32 %v744, %v745
        %s747 = vtos %v746
        %s748 = sld [smem:[#allocation2]]
        %s749 = sadd.f32 %s748, %s647
        %s750 = scalar_lea.smem [#allocation2], 0
        %751 = sst [smem:[%s750]] %s749
        %s752 = sld [smem:[#allocation2 + $0x1]]
        %s753 = sadd.f32 %s752, %s667
        %s754 = scalar_lea.smem [#allocation2], 1
        %755 = sst [smem:[%s754]] %s753
        %s756 = sld [smem:[#allocation2 + $0x2]]
        %s757 = sadd.f32 %s756, %s747
        %s758 = scalar_lea.smem [#allocation2], 2
        %759 = sst [smem:[%s758]] %s757
        // Predicated region
        $region45: #{tpu_custom_call.1} parent=35 // pred_check
          _
        $region46: #{tpu_custom_call.1} parent=35 // pred_check_branch
          %761 = sbr.rel (%p302) target = $region48
        $region47: #{tpu_custom_call.1} parent=35 // pred_region
          %s762 = sld [smem:[#allocation2]]
          %s763 = sld [smem:[#allocation2 + $0x1]]
          %s764 = smax.f32 %s763, 1.0
          %v765 = vstv %s764
          %v766 = vrcp.pop %v765
          %v767 = vmul.f32 %v765, %v766
          %v768 = vsub.f32 1.0, %v767
          %v769 = vmul.f32 %v766, %v768
          %v770 = vadd.f32 %v766, %v769
          %vm771 = vweird.f32 %v765
          %vm772 = vweird.f32 %v766
          %vm773 = vmor %vm771, %vm772
          %v774 = vsel %vm773, %v766, %v770
          %v775 = vand.u32 2147483647, %v765
          %vm776 = vcmp.eq.f32.partialorder %v775, 8.507059e+37
          %v777 = vand.u32 %v765, 2147483648
          %v778 = vor.u32 1.1754944e-38, %v777
          %v779 = vsel %vm776, %v778, %v774
          %s780 = vtos %v779
          %s781 = smul.f32 %s762, %s780
          %s782 = smul.f32 %s781, 0.5
          %s783 = sld [smem:[#allocation2 + $0x2]]
          %v784 = vrcp.pop 512.0
          %v785 = vmul.f32 512.0, %v784
          %v786 = vsub.f32 1.0, %v785
          %v787 = vmul.f32 %v784, %v786
          %v788 = vadd.f32 %v784, %v787
          %vm789 = vweird.f32 %v784
          %v790 = vsel %vm789, %v784, %v788
          %s791 = vtos %v790
          %s792 = smul.f32 %s783, %s791
          %s793 = sadd.f32 %s782, %s792
          %s794 = scalar_lea.smem [#allocation8], 0
          %795 = sst [smem:[%s794]] %s793
        $region48: #{tpu_custom_call.1} parent=35 // pred_fallthru
          _
        %s796 = sand.u32 %s144, 1
        %s797 = scalar_lea.sflag [#allocation5], %s796
        %s798 = sand.u32 %s144, 1
        %s799 = smul.addr %s798, 16
        %s800 = scalar_lea.vmem [#allocation7], %s799
        // Predicated region
        $region49: #{tpu_custom_call.1} parent=35 // pred_check
          %p801 = pneg %p154
        $region50: #{tpu_custom_call.1} parent=35 // pred_check_branch
          %803 = sbr.rel (%p801) target = $region52
        $region51: #{tpu_custom_call.1} parent=35 // pred_region
          %s804 = smul.u32 2, %s29
          %806 = vsyncadd %s797, 0
          %s807 = smul.addr %s28, 2
          %s808 = sadd.s32 %s804, %s807
          %s809 = smul.addr %s808, 8
          %s810 = scalar_lea.hbm %s4, %s809
          %s812 = sshll.u32 %s800, 4
          %s813 = int_to_ptr.vmem [resolvable:$true] %s812
          %s814 = sshll.u32 %s810, 4
          %s815 = int_to_ptr.hbm [resolvable:$true] %s814
          %817 = dma.vmem_to_hbm [thread:$0]  %s813, 256, %s815, %s797
        $region52: #{tpu_custom_call.1} parent=35 // pred_fallthru
          _
        // Predicated region
        $region53: #{tpu_custom_call.1} parent=35 // pred_check
          %p818 = pneg %p175
        $region54: #{tpu_custom_call.1} parent=35 // pred_check_branch
          %820 = sbr.rel (%p818) target = $region56
        $region55: #{tpu_custom_call.1} parent=35 // pred_region
          %822 = vsyncadd [#allocation6], 0
          %s824 = sshll.u32 %s5, 4
          %s825 = int_to_ptr.hbm [resolvable:$true] %s824
          %827 = dma.smem_to_hbm [#allocation8], 16, %s825, [#allocation6]
        $region56: #{tpu_custom_call.1} parent=35 // pred_fallthru
          _
        // Predicated region
        $region57: #{tpu_custom_call.1} parent=35 // pred_check
          %p828 = pneg %p175
        $region58: #{tpu_custom_call.1} parent=35 // pred_check_branch
          %830 = sbr.rel (%p828) target = $region60
        $region59: #{tpu_custom_call.1} parent=35 // pred_region
          %832 = dma.done [#allocation6], 16
        $region60: #{tpu_custom_call.1} parent=35 // pred_fallthru
          _
        %833 = sfence
      $region36: #{tpu_custom_call.1} parent=5 // pred_fallthru
        _
      %p834 = scmp.le.s32.totalorder 2, %s19
      // Predicated region
      $region61: #{tpu_custom_call.1} parent=5 // pred_check
        %p835 = pneg %p834
      $region62: #{tpu_custom_call.1} parent=5 // pred_check_branch
        %837 = sbr.rel (%p835) target = $region64
      $region63: #{tpu_custom_call.1} parent=5 // pred_region
        %s838 = ssub.s32 %s19, 2
        // Predicated region
        $region65: #{tpu_custom_call.1} parent=63 // pred_check
          %p839 = pneg %p160
        $region66: #{tpu_custom_call.1} parent=63 // pred_check_branch
          %841 = sbr.rel (%p839) target = $region68
        $region67: #{tpu_custom_call.1} parent=63 // pred_region
          %s842 = sand.u32 %s145, 1
          %s843 = scalar_lea.sflag [#allocation5], %s842
          %s844 = sand.u32 %s145, 1
          %s845 = smul.addr %s844, 16
          %s846 = scalar_lea.vmem [#allocation7], %s845
          %848 = dma.done %s843, 256
        $region68: #{tpu_custom_call.1} parent=63 // pred_fallthru
          _
      $region64: #{tpu_custom_call.1} parent=5 // pred_fallthru
        _
    $region6: #{tpu_custom_call.1} parent=1 // loop_footer
      %s23 = sadd.s32 1, %s19
    $region7: #{tpu_custom_call.1} parent=1 // loop_footer_branch
      %18 = sbr.rel target = $region3
    $region8: #{tpu_custom_call.1} parent=1 // loop_exit
      _
    %849 = vsyncpa [#allocation4], 1
    %s850 = scalar_lea.sflag [#allocation4], 1
    %851 = vsyncpa %s850, 1
    %852 = vsyncpa [#allocation5], 1
    %s853 = scalar_lea.sflag [#allocation5], 1
    %854 = vsyncpa %s853, 1
    %855 = vsyncpa [#allocation6], 1
    %s856 = scalar_lea.sflag [#allocation6], 1
    %857 = vsyncpa %s856, 1

</llo_original>
